<compile_context>
chip_gen: v6e
topology: v6e:2x2x1
jax: 0.10.0
libtpu: 0.0.40
codegen_flags: <defaults>
</compile_context>

<pallas_src>
import functools

import jax
import jax.numpy as jnp
from jax.experimental import pallas as pl
from jax.experimental.pallas import tpu as pltpu


def attention_block_kernel(g_ref, x_ref, wgt_ref, wxt_ref, b_ref, wp_ref, bp_ref, o_ref):
    # g_ref : (1, Cin, tm)     x_ref : (1, Cout, tm)
    # wgt_ref: (Cint, Cin)     wxt_ref: (Cint, Cout)
    # b_ref : (Cint, 1) f32 (= bg + bx)    wp_ref: (Cint, 1)    bp_ref: (1, 1) f32
    # o_ref : (1, Cout, tm)
    g = g_ref[0]                                   # (Cin, tm)
    x = x_ref[0]                                   # (Cout, tm)

    # 1x1 convs as channel-contraction matmuls on the MXU, f32 accumulation.
    g1 = jnp.dot(wgt_ref[...], g, preferred_element_type=jnp.float32)   # (Cint, tm)
    x1 = jnp.dot(wxt_ref[...], x, preferred_element_type=jnp.float32)   # (Cint, tm)
    h = jnp.maximum(g1 + x1 + b_ref[...], 0.0)                          # relu, f32

    # psi conv has a single output channel: VPU multiply + sublane reduce
    # (avoids a degenerate (tm, Cint) @ (Cint, 1) MXU matmul).
    psi = jnp.sum(h * wp_ref[...].astype(jnp.float32), axis=0, keepdims=True)  # (1, tm)
    psi = jax.nn.sigmoid(psi + bp_ref[...])                                    # EUP

    # Gate the skip connection; f32 math, single cast on store.
    o_ref[0] = (x.astype(jnp.float32) * psi).astype(o_ref.dtype)


def _round_up(a, b):
    return (a + b - 1) // b * b


def _footprint_bytes(tm, Cin, Cout, Cint, itemsize):
    """Rough per-step VMEM working set (double-buffered tiles + f32 intermediates + weights)."""
    act = 2 * (Cin + 2 * Cout) * tm * itemsize        # double-buffered g/x in + out tiles
    tmp = (3 * Cint + 2 * Cout + 2) * tm * 4          # f32 intermediates (g1, x1, h, ...)
    wts = 2 * Cint * (Cin + Cout + 2) * itemsize      # weights / biases (resident, 2 bufs)
    return act + tmp + wts


def _pick_tile(HW, Cin, Cout, Cint, itemsize, tm_max, vmem_budget_bytes):
    """Largest spatial tile (full row, or a multiple of 128) fitting the VMEM budget."""
    if HW <= tm_max and _footprint_bytes(HW, Cin, Cout, Cint, itemsize) <= vmem_budget_bytes:
        return HW                                     # single spatial tile per image
    tm = max(128, (min(tm_max, HW) // 128) * 128)
    while tm > 128 and _footprint_bytes(tm, Cin, Cout, Cint, itemsize) > vmem_budget_bytes:
        tm //= 2
    return tm


@functools.partial(jax.jit, static_argnames=("tm_max", "io_dtype"))
def attention_block(g, x, params, *, tm_max=2048, io_dtype=None):
    """g: (N, Cin, H, W), x: (N, Cout, H, W)  -- NCHW like the PyTorch module.

    io_dtype: optionally cast activations/weights (e.g. jnp.bfloat16) at the kernel
    boundary to halve HBM traffic on v6e/v7x; accumulation & elementwise stay f32.
    """
    wg, bg, wx, bx, wp, bp = params
    N, Cin, H, W = g.shape
    _, Cout, _, _ = x.shape
    Cint = wg.shape[1]
    HW = H * W
    out_dtype = x.dtype

    if io_dtype is not None:
        g = g.astype(io_dtype)
        x = x.astype(io_dtype)
        wg = wg.astype(io_dtype)
        wx = wx.astype(io_dtype)
        wp = wp.astype(io_dtype)

    # NCHW -> (N, C, H*W): pure reshape, no transpose / extra HBM traffic.
    g3 = g.reshape(N, Cin, HW)
    x3 = x.reshape(N, Cout, HW)

    itemsize = jnp.dtype(g.dtype).itemsize
    vmem_budget = 40 * 2**20                    # conservative: fits v7x's 64 MiB VMEM too
    tm = _pick_tile(HW, Cin, Cout, Cint, itemsize, tm_max, vmem_budget)

    HW_pad = _round_up(HW, tm)
    if HW_pad != HW:                            # remainder handling: zero-pad spatial axis
        pad = HW_pad - HW
        g3 = jnp.pad(g3, ((0, 0), (0, 0), (0, pad)))
        x3 = jnp.pad(x3, ((0, 0), (0, 0), (0, pad)))

    # Weights laid out for (Cint, C) @ (C, tm) matmuls; biases pre-summed once (f32).
    wgt = wg.T                                  # (Cint, Cin)
    wxt = wx.T                                  # (Cint, Cout)
    b = (bg.astype(jnp.float32) + bx.astype(jnp.float32)).reshape(Cint, 1)
    wp_col = wp.reshape(Cint, 1)
    bp2 = bp.astype(jnp.float32).reshape(1, 1)

    grid = (N, HW_pad // tm)

    # Advisory cost hint for XLA's scheduler around the custom call.
    flops = 2 * N * HW * (Cint * (Cin + Cout) + Cint) + 6 * N * HW * Cint
    bytes_accessed = (N * HW * (Cin + 2 * Cout)) * itemsize \
        + (Cint * (Cin + Cout + 2)) * itemsize
    cost = pl.CostEstimate(flops=flops, transcendentals=N * HW,
                           bytes_accessed=bytes_accessed)

    out3 = pl.pallas_call(
        attention_block_kernel,
        out_shape=jax.ShapeDtypeStruct((N, Cout, HW_pad), out_dtype),
        grid_spec=pltpu.PrefetchScalarGridSpec(
            num_scalar_prefetch=0,
            grid=grid,
            in_specs=[
                pl.BlockSpec((1, Cin, tm), lambda n, s: (n, 0, s)),    # g tile
                pl.BlockSpec((1, Cout, tm), lambda n, s: (n, 0, s)),   # x tile
                pl.BlockSpec((Cint, Cin), lambda n, s: (0, 0)),        # Wg^T (resident)
                pl.BlockSpec((Cint, Cout), lambda n, s: (0, 0)),       # Wx^T (resident)
                pl.BlockSpec((Cint, 1), lambda n, s: (0, 0)),          # bg + bx
                pl.BlockSpec((Cint, 1), lambda n, s: (0, 0)),          # Wpsi (column)
                pl.BlockSpec((1, 1), lambda n, s: (0, 0)),             # bpsi
            ],
            out_specs=pl.BlockSpec((1, Cout, tm), lambda n, s: (n, 0, s)),
        ),
        compiler_params=pltpu.CompilerParams(
            dimension_semantics=("parallel", "parallel"),
            vmem_limit_bytes=48 * 2**20,        # > v5e/v6e 16/32 MiB defaults, < v7x's 64 MiB
        ),
        cost_estimate=cost,
    )(g3, x3, wgt, wxt, b, wp_col, bp2)

    if HW_pad != HW:
        out3 = out3[:, :, :HW]
    return out3.reshape(N, Cout, H, W)


def init_params(key, in_channels, out_channels, inter_channels):
    """Deterministic init mimicking nn.Conv2d defaults (uniform +-1/sqrt(fan_in)).
    1x1 conv weights are stored as (C_in, C_out) matmul matrices."""
    k = jax.random.split(key, 6)

    def u(kk, shape, fan_in):
        bound = 1.0 / jnp.sqrt(float(fan_in))
        return jax.random.uniform(kk, shape, jnp.float32, -bound, bound)

    wg = u(k[0], (in_channels, inter_channels), in_channels)
    bg = u(k[1], (inter_channels,), in_channels)
    wx = u(k[2], (out_channels, inter_channels), out_channels)
    bx = u(k[3], (inter_channels,), out_channels)
    wp = u(k[4], (inter_channels, 1), inter_channels)
    bp = u(k[5], (1,), inter_channels)
    return (wg, bg, wx, bx, wp, bp)


def attention_block_ref(g, x, params):
    """Pure-JAX reference with identical semantics (sanity check)."""
    wg, bg, wx, bx, wp, bp = params
    g1 = jnp.einsum("nchw,cd->ndhw", g, wg) + bg[None, :, None, None]
    x1 = jnp.einsum("nchw,cd->ndhw", x, wx) + bx[None, :, None, None]
    h = jnp.maximum(g1 + x1, 0.0)
    psi = jnp.einsum("ndhw,do->nohw", h, wp) + bp[None, :, None, None]
    psi = jax.nn.sigmoid(psi)
    return x * psi


def _run_case(key, N, Cin, Cout, Cint, H, W):
    kg, kx, kp = jax.random.split(key, 3)
    g = jax.random.normal(kg, (N, Cin, H, W), jnp.float32)
    x = jax.random.normal(kx, (N, Cout, H, W), jnp.float32)
    params = init_params(kp, Cin, Cout, Cint)

    ref = attention_block_ref(g, x, params)

    # f32 I/O path (exact semantics of the PyTorch module).
    out = jax.block_until_ready(attention_block(g, x, params))
    assert out.shape == x.shape
    assert jnp.allclose(out, ref, atol=1e-5, rtol=1e-5), "f32 mismatch vs reference"

    # bf16 I/O path (v6e/v7x bandwidth optimization): f32 accumulation, loose tolerance.
    out_bf16 = jax.block_until_ready(attention_block(g, x, params, io_dtype=jnp.bfloat16))
    assert out_bf16.shape == x.shape
    assert jnp.allclose(out_bf16, ref, atol=1e-1, rtol=1e-1), "bf16 mismatch vs reference"


if __name__ == "__main__":
    key = jax.random.PRNGKey(0)
    k1, k2 = jax.random.split(key, 2)

    # Small canonical shapes.
    _run_case(k1, N=2, Cin=4, Cout=4, Cint=8, H=16, W=16)
    # Irregular channel counts (exercise full-dim, non-8-multiple blocks).
    _run_case(k2, N=2, Cin=3, Cout=5, Cint=6, H=16, W=16)

    print("KERNEL_OK")
</pallas_src>

<mosaic_0001>
module attributes {stable_mosaic.version = 11 : i64} {
  func.func @attention_block_kernel(%arg0: i32, %arg1: i32, %arg2: memref<1x4x256xf32, #tpu.memory_space<vmem>>, %arg3: memref<1x4x256xf32, #tpu.memory_space<vmem>>, %arg4: memref<8x4xf32, #tpu.memory_space<vmem>>, %arg5: memref<8x4xf32, #tpu.memory_space<vmem>>, %arg6: memref<8x1xf32, #tpu.memory_space<vmem>>, %arg7: memref<8x1xf32, #tpu.memory_space<vmem>>, %arg8: memref<1x1xf32, #tpu.memory_space<vmem>>, %arg9: memref<1x4x256xf32, #tpu.memory_space<vmem>>) attributes {dimension_semantics = [#tpu.dimension_semantics<parallel>, #tpu.dimension_semantics<parallel>], iteration_bounds = array<i64: 2, 1>, scalar_prefetch = 0 : i64, scratch_operands = 0 : i64, tpu.core_type = #tpu.core_type<tc>, window_params = [{transform_indices = @transform_0, window_bounds = array<i64: 1, 4, 256>}, {transform_indices = @transform_1, window_bounds = array<i64: 1, 4, 256>}, {pipeline_mode = #tpu.pipeline_mode<synchronous>, transform_indices = @transform_2, window_bounds = array<i64: 8, 4>}, {pipeline_mode = #tpu.pipeline_mode<synchronous>, transform_indices = @transform_3, window_bounds = array<i64: 8, 4>}, {pipeline_mode = #tpu.pipeline_mode<synchronous>, transform_indices = @transform_4, window_bounds = array<i64: 8, 1>}, {pipeline_mode = #tpu.pipeline_mode<synchronous>, transform_indices = @transform_5, window_bounds = array<i64: 8, 1>}, {pipeline_mode = #tpu.pipeline_mode<synchronous>, transform_indices = @transform_6, window_bounds = array<i64: 1, 1>}, {transform_indices = @transform_7, window_bounds = array<i64: 1, 4, 256>}]} {
    %c0 = arith.constant 0 : index
    %c0_0 = arith.constant 0 : index
    %c0_1 = arith.constant 0 : index
    %0 = vector.load %arg2[%c0, %c0_0, %c0_1] : memref<1x4x256xf32, #tpu.memory_space<vmem>>, vector<1x4x256xf32>
    %1 = vector.shape_cast %0 : vector<1x4x256xf32> to vector<4x256xf32>
    %c0_2 = arith.constant 0 : index
    %c0_3 = arith.constant 0 : index
    %c0_4 = arith.constant 0 : index
    %2 = vector.load %arg3[%c0_2, %c0_3, %c0_4] : memref<1x4x256xf32, #tpu.memory_space<vmem>>, vector<1x4x256xf32>
    %3 = vector.shape_cast %2 : vector<1x4x256xf32> to vector<4x256xf32>
    %c0_5 = arith.constant 0 : index
    %c0_6 = arith.constant 0 : index
    %4 = vector.load %arg4[%c0_5, %c0_6] : memref<8x4xf32, #tpu.memory_space<vmem>>, vector<8x4xf32>
    %cst = arith.constant dense<0.000000e+00> : vector<8x256xf32>
    %5 = tpu.matmul %4, %1, %cst {dimension_numbers = #tpu.dot_dimension_numbers<[1], [0], [0], [1], [0, 0, 1, 1], [], []>} : vector<8x4xf32>, vector<4x256xf32>, vector<8x256xf32> -> vector<8x256xf32>
    %c0_7 = arith.constant 0 : index
    %c0_8 = arith.constant 0 : index
    %6 = vector.load %arg5[%c0_7, %c0_8] : memref<8x4xf32, #tpu.memory_space<vmem>>, vector<8x4xf32>
    %cst_9 = arith.constant dense<0.000000e+00> : vector<8x256xf32>
    %7 = tpu.matmul %6, %3, %cst_9 {dimension_numbers = #tpu.dot_dimension_numbers<[1], [0], [0], [1], [0, 0, 1, 1], [], []>} : vector<8x4xf32>, vector<4x256xf32>, vector<8x256xf32> -> vector<8x256xf32>
    %8 = arith.addf %5, %7 : vector<8x256xf32>
    %c0_10 = arith.constant 0 : index
    %c0_11 = arith.constant 0 : index
    %9 = vector.load %arg6[%c0_10, %c0_11] : memref<8x1xf32, #tpu.memory_space<vmem>>, vector<8x1xf32>
    %10 = vector.broadcast %9 : vector<8x1xf32> to vector<8x256xf32>
    %11 = arith.addf %8, %10 : vector<8x256xf32>
    %cst_12 = arith.constant 0.000000e+00 : f32
    %12 = vector.broadcast %cst_12 : f32 to vector<8x256xf32>
    %13 = arith.maximumf %11, %12 : vector<8x256xf32>
    %c0_13 = arith.constant 0 : index
    %c0_14 = arith.constant 0 : index
    %14 = vector.load %arg7[%c0_13, %c0_14] : memref<8x1xf32, #tpu.memory_space<vmem>>, vector<8x1xf32>
    %15 = vector.broadcast %14 : vector<8x1xf32> to vector<8x256xf32>
    %16 = arith.mulf %13, %15 : vector<8x256xf32>
    %cst_15 = arith.constant dense<0.000000e+00> : vector<256xf32>
    %17 = vector.multi_reduction <add>, %16, %cst_15 [0] : vector<8x256xf32> to vector<256xf32>
    %18 = vector.shape_cast %17 : vector<256xf32> to vector<1x256xf32>
    %c0_16 = arith.constant 0 : index
    %c0_17 = arith.constant 0 : index
    %19 = vector.load %arg8[%c0_16, %c0_17] : memref<1x1xf32, #tpu.memory_space<vmem>>, vector<1x1xf32>
    %20 = vector.broadcast %19 : vector<1x1xf32> to vector<1x256xf32>
    %21 = arith.addf %18, %20 : vector<1x256xf32>
    %22 = arith.negf %21 : vector<1x256xf32>
    %23 = math.exp %22 : vector<1x256xf32>
    %cst_18 = arith.constant 1.000000e+00 : f32
    %24 = vector.broadcast %cst_18 : f32 to vector<1x256xf32>
    %25 = arith.addf %24, %23 : vector<1x256xf32>
    %26 = arith.divf %24, %25 : vector<1x256xf32>
    %27 = vector.broadcast %26 : vector<1x256xf32> to vector<4x256xf32>
    %28 = arith.mulf %3, %27 : vector<4x256xf32>
    %c0_19 = arith.constant 0 : index
    %c0_20 = arith.constant 0 : index
    %c0_21 = arith.constant 0 : index
    %29 = vector.load %arg9[%c0_19, %c0_20, %c0_21] : memref<1x4x256xf32, #tpu.memory_space<vmem>>, vector<1x4x256xf32>
    %30 = vector.shape_cast %29 : vector<1x4x256xf32> to vector<4x256xf32>
    %31 = vector.shape_cast %28 : vector<4x256xf32> to vector<1x4x256xf32>
    tpu.vector_store %arg9[%c0_19, %c0_20, %c0_21], %31 {strides = array<i32>} : memref<1x4x256xf32, #tpu.memory_space<vmem>>, vector<1x4x256xf32>,
    return
  }
  func.func @transform_0(%arg0: i32, %arg1: i32) -> (i32, i32, i32) {
    %c0_i32 = arith.constant 0 : i32
    %c0_i32_0 = arith.constant 0 : i32
    return %arg0, %c0_i32, %arg1 : i32, i32, i32
  }
  func.func @transform_1(%arg0: i32, %arg1: i32) -> (i32, i32, i32) {
    %c0_i32 = arith.constant 0 : i32
    %c0_i32_0 = arith.constant 0 : i32
    return %arg0, %c0_i32, %arg1 : i32, i32, i32
  }
  func.func @transform_2(%arg0: i32, %arg1: i32) -> (i32, i32) {
    %c0_i32 = arith.constant 0 : i32
    %c0_i32_0 = arith.constant 0 : i32
    %c0_i32_1 = arith.constant 0 : i32
    return %c0_i32, %c0_i32_0 : i32, i32
  }
  func.func @transform_3(%arg0: i32, %arg1: i32) -> (i32, i32) {
    %c0_i32 = arith.constant 0 : i32
    %c0_i32_0 = arith.constant 0 : i32
    %c0_i32_1 = arith.constant 0 : i32
    return %c0_i32, %c0_i32_0 : i32, i32
  }
  func.func @transform_4(%arg0: i32, %arg1: i32) -> (i32, i32) {
    %c0_i32 = arith.constant 0 : i32
    %c0_i32_0 = arith.constant 0 : i32
    %c0_i32_1 = arith.constant 0 : i32
    return %c0_i32, %c0_i32_0 : i32, i32
  }
  func.func @transform_5(%arg0: i32, %arg1: i32) -> (i32, i32) {
    %c0_i32 = arith.constant 0 : i32
    %c0_i32_0 = arith.constant 0 : i32
    %c0_i32_1 = arith.constant 0 : i32
    return %c0_i32, %c0_i32_0 : i32, i32
  }
  func.func @transform_6(%arg0: i32, %arg1: i32) -> (i32, i32) {
    %c0_i32 = arith.constant 0 : i32
    %c0_i32_0 = arith.constant 0 : i32
    %c0_i32_1 = arith.constant 0 : i32
    return %c0_i32, %c0_i32_0 : i32, i32
  }
  func.func @transform_7(%arg0: i32, %arg1: i32) -> (i32, i32, i32) {
    %c0_i32 = arith.constant 0 : i32
    %c0_i32_0 = arith.constant 0 : i32
    return %arg0, %c0_i32, %arg1 : i32, i32, i32
  }
}

</mosaic_0001>

<llo_original>
// kernel: attention_block.1
$region0: #{attention_block.1}
  #allocation0 [shape = 'u32[]', space=smem, size = 0x4, offset = 0x4, fixed_abs, tag = 'smem constant byte address 0x4 - core index']
  #allocation1 [shape = 'u32[144,128]{1,0:T(1,128)}', space=vmem, size = 0x12000, scoped, tag = 'internal scratch']
  #allocation2 [shape = 'f32[1,1]{1,0:T(1,128)S(1)}', space=vmem, size = 0x200, scoped, tag = 'scoped memory for attention_block.1']
  %s0 = inlined_call_operand.vmem [shape: f32[2,4,256], index: 0, kind: input, shape index: {}]
  %s1 = inlined_call_operand.vmem [shape: f32[2,4,256], index: 1, kind: input, shape index: {}]
  %s2 = inlined_call_operand.vmem [shape: f32[8,4], index: 2, kind: input, shape index: {}]
  %s3 = inlined_call_operand.vmem [shape: f32[8,4], index: 3, kind: input, shape index: {}]
  %s4 = inlined_call_operand.vmem [shape: f32[8,1], index: 4, kind: input, shape index: {}]
  %s5 = inlined_call_operand.vmem [shape: f32[8,1], index: 5, kind: input, shape index: {}]
  %s6 = inlined_call_operand.<no memory space> [shape: f32[1,1], index: 6, kind: input, shape index: {}]
  %s7 = inlined_call_operand.vmem [shape: f32[2,4,256], index: 7, kind: output, shape index: {}]
  %s8 = sld [smem:[#allocation0]]
  $region61: #{attention_block.1} parent=0
    _
  %s10 = ssub.s32 1, %s8
  %s11 = scalar_select 0, %s10, %s8
  %v12 = vstv %s6
  %13 = vst [vmem:[#allocation2] sm:$0x1] %v12
  loop: start=0, step=1, limit=4
  $region2: #{attention_block.1} parent=0 // loop_pre_header
    _
  $region3: #{attention_block.1} parent=0 // loop_header
    %s15 = sphi 0, %s19
    %p16 = scmp.ge.s32.totalorder %s15, 4
    %s22 = sphi 0, %s34
    %s23 = sphi 0, %s30
    %s24 = sphi 0, %s22
    %s25 = sphi 0, %s23
    %s26 = sphi 0, %s24
    %s27 = sphi 0, %s25
    %s39 = sphi 0, %s41
    %s42 = sphi 0, %s39
    %s43 = sphi 0, %s42
    %s59 = sphi 0, %s43
    %s67 = sphi 0, %s69
    %s70 = sphi 0, %s67
    %s71 = sphi 0, %s70
    %s87 = sphi 0, %s71
    %s91 = sphi 0, %s91
    %s93 = sphi 0, %s91
    %s94 = sphi 0, %s93
    %s108 = sphi 0, %s94
    %s112 = sphi 0, %s112
    %s114 = sphi 0, %s112
    %s115 = sphi 0, %s114
    %s129 = sphi 0, %s115
    %s133 = sphi 0, %s133
    %s135 = sphi 0, %s133
    %s136 = sphi 0, %s135
    %s150 = sphi 0, %s136
    %s154 = sphi 0, %s154
    %s156 = sphi 0, %s154
    %s157 = sphi 0, %s156
    %s171 = sphi 0, %s157
    %s175 = sphi 0, %s175
    %s177 = sphi 0, %s175
    %s178 = sphi 0, %s177
    %s192 = sphi 0, %s178
    %s200 = sphi 0, %s202
    %s203 = sphi 0, %s200
    %s204 = sphi 0, %s203
    %s220 = sphi 0, %s204
  $region4: #{attention_block.1} parent=0 // loop_header_branch
    %18 = sbr.rel (%p16) target = $region8
  $region5: #{attention_block.1} parent=0 // loop_body
    %s20 = ssub.s32 %s15, 1
    %s21 = ssub.s32 %s15, 2
    %s28 = sadd.s32 1, %s23
    %p29 = scmp.ge.s32.totalorder %s28, 1
    %s30 = scalar_select %p29, 0, %s28
    %s31 = sadd.s32 1, %s22
    %s32 = scalar_select %p29, %s31, %s22
    %p33 = scmp.ge.s32.totalorder %s32, 2
    %s34 = scalar_select %p33, 0, %s32
    %s35 = ssub.s32 %s22, %s34
    %s36 = ssub.s32 %s23, %s30
    %s37 = sor.u32 %s35, %s36
    %p38 = scmp.eq.s32.totalorder %s37, 0
    %s40 = sadd.s32 %s39, 1
    %s41 = scalar_select %p38, %s39, %s40
    %p44 = pneg %p38
    %p45 = scmp.eq.s32.totalorder %s15, 1
    %p46 = por %p44, %p45
    %p47 = scmp.ne.s32.totalorder %s39, %s42
    %p48 = scmp.eq.s32.totalorder %s15, 0
    %p49 = por %p47, %p48
    %p50 = scmp.ne.s32.totalorder %s39, %s42
    %p51 = scmp.eq.s32.totalorder %s20, 1
    %p52 = por %p50, %p51
    %p53 = scmp.ne.s32.totalorder %s42, %s43
    %p54 = scmp.eq.s32.totalorder %s20, 0
    %p55 = por %p53, %p54
    %p56 = scmp.ne.s32.totalorder %s42, %s43
    %p57 = scmp.eq.s32.totalorder %s21, 1
    %p58 = por %p56, %p57
    %p60 = scmp.ne.s32.totalorder %s43, %s59
    %p61 = scmp.eq.s32.totalorder %s21, 0
    %p62 = por %p60, %p61
    %s63 = ssub.s32 %s22, %s34
    %s64 = ssub.s32 %s23, %s30
    %s65 = sor.u32 %s63, %s64
    %p66 = scmp.eq.s32.totalorder %s65, 0
    %s68 = sadd.s32 %s67, 1
    %s69 = scalar_select %p66, %s67, %s68
    %p72 = pneg %p66
    %p73 = scmp.eq.s32.totalorder %s15, 1
    %p74 = por %p72, %p73
    %p75 = scmp.ne.s32.totalorder %s67, %s70
    %p76 = scmp.eq.s32.totalorder %s15, 0
    %p77 = por %p75, %p76
    %p78 = scmp.ne.s32.totalorder %s67, %s70
    %p79 = scmp.eq.s32.totalorder %s20, 1
    %p80 = por %p78, %p79
    %p81 = scmp.ne.s32.totalorder %s70, %s71
    %p82 = scmp.eq.s32.totalorder %s20, 0
    %p83 = por %p81, %p82
    %p84 = scmp.ne.s32.totalorder %s70, %s71
    %p85 = scmp.eq.s32.totalorder %s21, 1
    %p86 = por %p84, %p85
    %p88 = scmp.ne.s32.totalorder %s71, %s87
    %p89 = scmp.eq.s32.totalorder %s21, 0
    %p90 = por %p88, %p89
    %s92 = sadd.s32 %s91, 1
    %p95 = scmp.eq.s32.totalorder %s15, 1
    %p96 = scmp.ne.s32.totalorder %s91, %s93
    %p97 = scmp.eq.s32.totalorder %s15, 0
    %p98 = por %p96, %p97
    %p99 = scmp.ne.s32.totalorder %s91, %s93
    %p100 = scmp.eq.s32.totalorder %s20, 1
    %p101 = por %p99, %p100
    %p102 = scmp.ne.s32.totalorder %s93, %s94
    %p103 = scmp.eq.s32.totalorder %s20, 0
    %p104 = por %p102, %p103
    %p105 = scmp.ne.s32.totalorder %s93, %s94
    %p106 = scmp.eq.s32.totalorder %s21, 1
    %p107 = por %p105, %p106
    %p109 = scmp.ne.s32.totalorder %s94, %s108
    %p110 = scmp.eq.s32.totalorder %s21, 0
    %p111 = por %p109, %p110
    %s113 = sadd.s32 %s112, 1
    %p116 = scmp.eq.s32.totalorder %s15, 1
    %p117 = scmp.ne.s32.totalorder %s112, %s114
    %p118 = scmp.eq.s32.totalorder %s15, 0
    %p119 = por %p117, %p118
    %p120 = scmp.ne.s32.totalorder %s112, %s114
    %p121 = scmp.eq.s32.totalorder %s20, 1
    %p122 = por %p120, %p121
    %p123 = scmp.ne.s32.totalorder %s114, %s115
    %p124 = scmp.eq.s32.totalorder %s20, 0
    %p125 = por %p123, %p124
    %p126 = scmp.ne.s32.totalorder %s114, %s115
    %p127 = scmp.eq.s32.totalorder %s21, 1
    %p128 = por %p126, %p127
    %p130 = scmp.ne.s32.totalorder %s115, %s129
    %p131 = scmp.eq.s32.totalorder %s21, 0
    %p132 = por %p130, %p131
    %s134 = sadd.s32 %s133, 1
    %p137 = scmp.eq.s32.totalorder %s15, 1
    %p138 = scmp.ne.s32.totalorder %s133, %s135
    %p139 = scmp.eq.s32.totalorder %s15, 0
    %p140 = por %p138, %p139
    %p141 = scmp.ne.s32.totalorder %s133, %s135
    %p142 = scmp.eq.s32.totalorder %s20, 1
    %p143 = por %p141, %p142
    %p144 = scmp.ne.s32.totalorder %s135, %s136
    %p145 = scmp.eq.s32.totalorder %s20, 0
    %p146 = por %p144, %p145
    %p147 = scmp.ne.s32.totalorder %s135, %s136
    %p148 = scmp.eq.s32.totalorder %s21, 1
    %p149 = por %p147, %p148
    %p151 = scmp.ne.s32.totalorder %s136, %s150
    %p152 = scmp.eq.s32.totalorder %s21, 0
    %p153 = por %p151, %p152
    %s155 = sadd.s32 %s154, 1
    %p158 = scmp.eq.s32.totalorder %s15, 1
    %p159 = scmp.ne.s32.totalorder %s154, %s156
    %p160 = scmp.eq.s32.totalorder %s15, 0
    %p161 = por %p159, %p160
    %p162 = scmp.ne.s32.totalorder %s154, %s156
    %p163 = scmp.eq.s32.totalorder %s20, 1
    %p164 = por %p162, %p163
    %p165 = scmp.ne.s32.totalorder %s156, %s157
    %p166 = scmp.eq.s32.totalorder %s20, 0
    %p167 = por %p165, %p166
    %p168 = scmp.ne.s32.totalorder %s156, %s157
    %p169 = scmp.eq.s32.totalorder %s21, 1
    %p170 = por %p168, %p169
    %p172 = scmp.ne.s32.totalorder %s157, %s171
    %p173 = scmp.eq.s32.totalorder %s21, 0
    %p174 = por %p172, %p173
    %s176 = sadd.s32 %s175, 1
    %p179 = scmp.eq.s32.totalorder %s15, 1
    %p180 = scmp.ne.s32.totalorder %s175, %s177
    %p181 = scmp.eq.s32.totalorder %s15, 0
    %p182 = por %p180, %p181
    %p183 = scmp.ne.s32.totalorder %s175, %s177
    %p184 = scmp.eq.s32.totalorder %s20, 1
    %p185 = por %p183, %p184
    %p186 = scmp.ne.s32.totalorder %s177, %s178
    %p187 = scmp.eq.s32.totalorder %s20, 0
    %p188 = por %p186, %p187
    %p189 = scmp.ne.s32.totalorder %s177, %s178
    %p190 = scmp.eq.s32.totalorder %s21, 1
    %p191 = por %p189, %p190
    %p193 = scmp.ne.s32.totalorder %s178, %s192
    %p194 = scmp.eq.s32.totalorder %s21, 0
    %p195 = por %p193, %p194
    %s196 = ssub.s32 %s22, %s34
    %s197 = ssub.s32 %s23, %s30
    %s198 = sor.u32 %s196, %s197
    %p199 = scmp.eq.s32.totalorder %s198, 0
    %s201 = sadd.s32 %s200, 1
    %s202 = scalar_select %p199, %s200, %s201
    %p205 = pneg %p199
    %p206 = scmp.eq.s32.totalorder %s15, 1
    %p207 = por %p205, %p206
    %p208 = scmp.ne.s32.totalorder %s200, %s203
    %p209 = scmp.eq.s32.totalorder %s15, 0
    %p210 = por %p208, %p209
    %p211 = scmp.ne.s32.totalorder %s200, %s203
    %p212 = scmp.eq.s32.totalorder %s20, 1
    %p213 = por %p211, %p212
    %p214 = scmp.ne.s32.totalorder %s203, %s204
    %p215 = scmp.eq.s32.totalorder %s20, 0
    %p216 = por %p214, %p215
    %p217 = scmp.ne.s32.totalorder %s203, %s204
    %p218 = scmp.eq.s32.totalorder %s21, 1
    %p219 = por %p217, %p218
    %p221 = scmp.ne.s32.totalorder %s204, %s220
    %p222 = scmp.eq.s32.totalorder %s21, 0
    %p223 = por %p221, %p222
    %p224 = scmp.le.s32.totalorder 1, %s15
    %p225 = scmp.lt.s32.totalorder %s15, 3
    %p226 = pnand %p224, %p225
    %p227 = pneg %p226
    // Predicated region
    $region9: #{attention_block.1} parent=5 // pred_check
      _
    $region10: #{attention_block.1} parent=5 // pred_check_branch
      %229 = sbr.rel (%p226) target = $region12
    $region11: #{attention_block.1} parent=5 // pred_region
      %s230 = ssub.s32 %s15, 1
      // Predicated region
      $region13: #{attention_block.1} parent=11 // pred_check
        %p231 = pneg %p104
      $region14: #{attention_block.1} parent=11 // pred_check_branch
        %233 = sbr.rel (%p231) target = $region16
      $region15: #{attention_block.1} parent=11 // pred_region
        _
      $region16: #{attention_block.1} parent=11 // pred_fallthru
        _
      // Predicated region
      $region17: #{attention_block.1} parent=11 // pred_check
        %p234 = pneg %p125
      $region18: #{attention_block.1} parent=11 // pred_check_branch
        %236 = sbr.rel (%p234) target = $region20
      $region19: #{attention_block.1} parent=11 // pred_region
        _
      $region20: #{attention_block.1} parent=11 // pred_fallthru
        _
      // Predicated region
      $region21: #{attention_block.1} parent=11 // pred_check
        %p237 = pneg %p146
      $region22: #{attention_block.1} parent=11 // pred_check_branch
        %239 = sbr.rel (%p237) target = $region24
      $region23: #{attention_block.1} parent=11 // pred_region
        _
      $region24: #{attention_block.1} parent=11 // pred_fallthru
        _
      // Predicated region
      $region25: #{attention_block.1} parent=11 // pred_check
        %p240 = pneg %p167
      $region26: #{attention_block.1} parent=11 // pred_check_branch
        %242 = sbr.rel (%p240) target = $region28
      $region27: #{attention_block.1} parent=11 // pred_region
        _
      $region28: #{attention_block.1} parent=11 // pred_fallthru
        _
      // Predicated region
      $region29: #{attention_block.1} parent=11 // pred_check
        %p243 = pneg %p188
      $region30: #{attention_block.1} parent=11 // pred_check_branch
        %245 = sbr.rel (%p243) target = $region32
      $region31: #{attention_block.1} parent=11 // pred_region
        _
      $region32: #{attention_block.1} parent=11 // pred_fallthru
        _
    $region12: #{attention_block.1} parent=5 // pred_fallthru
      _
    %p246 = scmp.lt.s32.totalorder %s15, 2
    // Predicated region
    $region33: #{attention_block.1} parent=5 // pred_check
      %p247 = pneg %p246
    $region34: #{attention_block.1} parent=5 // pred_check_branch
      %249 = sbr.rel (%p247) target = $region36
    $region35: #{attention_block.1} parent=5 // pred_region
      // Predicated region
      $region37: #{attention_block.1} parent=35 // pred_check
        %p250 = pneg %p49
      $region38: #{attention_block.1} parent=35 // pred_check_branch
        %252 = sbr.rel (%p250) target = $region40
      $region39: #{attention_block.1} parent=35 // pred_region
        %s253 = smul.u32 2, %s23
        %p254 = scmp.lt.s32.totalorder %s22, 1
        %s255 = scalar_select %p254, %s22, 1
        %p256 = scmp.lt.s32.totalorder %s253, 1
        %s257 = scalar_select %p256, %s253, 1
        %s258 = smul.addr %s255, 2
        %s259 = sadd.s32 %s257, %s258
        %s260 = smul.addr %s259, 4
        %s261 = scalar_lea.vmem %s0, %s260
        %s262 = smul.u32 2, %s23
      $region40: #{attention_block.1} parent=35 // pred_fallthru
        _
      // Predicated region
      $region41: #{attention_block.1} parent=35 // pred_check
        %p263 = pneg %p77
      $region42: #{attention_block.1} parent=35 // pred_check_branch
        %265 = sbr.rel (%p263) target = $region44
      $region43: #{attention_block.1} parent=35 // pred_region
        %s266 = smul.u32 2, %s23
        %p267 = scmp.lt.s32.totalorder %s22, 1
        %s268 = scalar_select %p267, %s22, 1
        %p269 = scmp.lt.s32.totalorder %s266, 1
        %s270 = scalar_select %p269, %s266, 1
        %s271 = smul.addr %s268, 2
        %s272 = sadd.s32 %s270, %s271
        %s273 = smul.addr %s272, 4
        %s274 = scalar_lea.vmem %s1, %s273
        %s275 = smul.u32 2, %s23
      $region44: #{attention_block.1} parent=35 // pred_fallthru
        _
    $region36: #{attention_block.1} parent=5 // pred_fallthru
      _
    %p276 = scmp.le.s32.totalorder 1, %s15
    %p277 = scmp.lt.s32.totalorder %s15, 3
    %p278 = pnand %p276, %p277
    %p279 = pneg %p278
    // Predicated region
    $region45: #{attention_block.1} parent=5 // pred_check
      _
    $region46: #{attention_block.1} parent=5 // pred_check_branch
      %281 = sbr.rel (%p278) target = $region48
    $region47: #{attention_block.1} parent=5 // pred_region
      %s282 = ssub.s32 %s15, 1
      %s283 = smul.u32 2, %s25
      %p284 = scmp.lt.s32.totalorder %s24, 1
      %s285 = scalar_select %p284, %s24, 1
      %p286 = scmp.lt.s32.totalorder %s283, 1
      %s287 = scalar_select %p286, %s283, 1
      %s288 = smul.addr %s285, 2
      %s289 = sadd.s32 %s287, %s288
      %s290 = smul.addr %s289, 4
      %s291 = scalar_lea.vmem %s0, %s290
      %p292 = pneg %p55
      %p293 = pneg %p52
      %s294 = smul.u32 2, %s25
      %p295 = scmp.lt.s32.totalorder %s24, 1
      %s296 = scalar_select %p295, %s24, 1
      %p297 = scmp.lt.s32.totalorder %s294, 1
      %s298 = scalar_select %p297, %s294, 1
      %s299 = smul.addr %s296, 2
      %s300 = sadd.s32 %s298, %s299
      %s301 = smul.addr %s300, 4
      %s302 = scalar_lea.vmem %s1, %s301
      %p303 = pneg %p83
      %p304 = pneg %p80
      %p305 = pneg %p104
      %p306 = pneg %p101
      %p307 = pneg %p125
      %p308 = pneg %p122
      %p309 = pneg %p146
      %p310 = pneg %p143
      %p311 = pneg %p167
      %p312 = pneg %p164
      %p313 = pneg %p188
      %p314 = pneg %p185
      %p315 = pneg %p216
      %p316 = pneg %p213
      %s317 = smul.u32 2, %s25
      %p318 = scmp.lt.s32.totalorder %s24, 1
      %s319 = scalar_select %p318, %s24, 1
      %p320 = scmp.lt.s32.totalorder %s317, 1
      %s321 = scalar_select %p320, %s317, 1
      %s322 = smul.addr %s319, 2
      %s323 = sadd.s32 %s321, %s322
      %s324 = smul.addr %s323, 4
      %s325 = scalar_lea.vmem %s7, %s324
      %s326 = smul.u32 2, %s25
      %p327 = scmp.lt.s32.totalorder %s24, 1
      %s328 = scalar_select %p327, %s24, 1
      %p329 = scmp.lt.s32.totalorder %s326, 1
      %s330 = scalar_select %p329, %s326, 1
      %s331 = smul.addr %s328, 2
      %s332 = sadd.s32 %s330, %s331
      %s333 = smul.addr %s332, 4
      %s334 = scalar_lea.vmem %s0, %s333
      %s335 = smul.u32 2, %s25
      %s336 = smul.u32 2, %s25
      %p337 = scmp.lt.s32.totalorder %s24, 1
      %s338 = scalar_select %p337, %s24, 1
      %p339 = scmp.lt.s32.totalorder %s336, 1
      %s340 = scalar_select %p339, %s336, 1
      %s341 = smul.addr %s338, 2
      %s342 = sadd.s32 %s340, %s341
      %s343 = smul.addr %s342, 4
      %s344 = scalar_lea.vmem %s1, %s343
      %s345 = smul.u32 2, %s25
      %s346 = smul.u32 2, %s25
      %p347 = scmp.lt.s32.totalorder %s24, 1
      %s348 = scalar_select %p347, %s24, 1
      %p349 = scmp.lt.s32.totalorder %s346, 1
      %s350 = scalar_select %p349, %s346, 1
      %s351 = smul.addr %s348, 2
      %s352 = sadd.s32 %s350, %s351
      %s353 = smul.addr %s352, 4
      %s354 = scalar_lea.vmem %s7, %s353
      %s355 = smul.u32 2, %s25
      %v356 = vld [vmem:[%s334] sm:$0xff]
      %v357 = vld [vmem:[%s344] sm:$0xff]
      %v358 = vld [vmem:[%s2] sm:$0xff]
      %v359 = vld [vmem:[%s3] sm:$0xff]
      %v361 = vcombine.high %v357, %v357
      %vm362 = vcmask 31744
      %v364 = vsel %vm362, %v359, 0
      %vm366 = vcmask 1043456
      %v367 = vsel %vm366, %v357, 0
      %v369 = vsel %vm366, %v361, 0
      %371 = vmatprep.subr.mxu0 0.0
      %372 = vmatpush1.msra.mxu0 0.0
      %373 = vmatprep.subr.mxu0 0.0
      %374 = vmatpush1.msra.mxu0 0.0
      %375 = vmatprep.subr.mxu0 0.0
      %376 = vmatpush1.msra.mxu0 0.0
      %377 = vmatprep.subr.mxu0 0.0
      %378 = vmatpush1.msra.mxu0 0.0
      %379 = vmatprep.subr.mxu0 0.0
      %380 = vmatpush1.msra.mxu0 0.0
      %381 = vmatprep.subr.mxu0 0.0
      %382 = vmatpush1.msra.mxu0 0.0
      %383 = vmatprep.subr.mxu0 0.0
      %384 = vmatpush1.msra.mxu0 0.0
      %385 = vmatprep.subr.mxu0 0.0
      %386 = vmatpush1.msra.mxu0 0.0
      %387 = vmatprep.subr.mxu0 0.0
      %388 = vmatpush1.msra.mxu0 0.0
      %389 = vmatprep.subr.mxu0 0.0
      %390 = vmatpush1.msra.mxu0 0.0
      %391 = vmatprep.subr.mxu0 0.0
      %392 = vmatpush1.msra.mxu0 0.0
      %393 = vmatprep.subr.mxu0 0.0
      %394 = vmatpush1.msra.mxu0 0.0
      %395 = vmatprep.subr.mxu0 0.0
      %396 = vmatpush1.msra.mxu0 0.0
      %397 = vmatprep.subr.mxu0 0.0
      %398 = vmatpush1.msra.mxu0 0.0
      %399 = vmatprep.subr.mxu0 0.0
      %400 = vmatpush1.msra.mxu0 0.0
      %401 = vmatprep.subr.mxu0 %v369
      %402 = vmatpush1.msra.mxu0 %v367
      %403 = vmatprep.subr.mxu0 0.0
      %404 = vmatpush2.msra.mxu0 0.0
      %405 = vmatprep.subr.mxu0 0.0
      %406 = vmatpush2.msra.mxu0 0.0
      %407 = vmatprep.subr.mxu0 0.0
      %408 = vmatpush2.msra.mxu0 0.0
      %409 = vmatprep.subr.mxu0 0.0
      %410 = vmatpush2.msra.mxu0 0.0
      %411 = vmatprep.subr.mxu0 0.0
      %412 = vmatpush2.msra.mxu0 0.0
      %413 = vmatprep.subr.mxu0 0.0
      %414 = vmatpush2.msra.mxu0 0.0
      %415 = vmatprep.subr.mxu0 0.0
      %416 = vmatpush2.msra.mxu0 0.0
      %417 = vmatprep.subr.mxu0 0.0
      %418 = vmatpush2.msra.mxu0 0.0
      %419 = vmatprep.subr.mxu0 0.0
      %420 = vmatpush2.msra.mxu0 0.0
      %421 = vmatprep.subr.mxu0 0.0
      %422 = vmatpush2.msra.mxu0 0.0
      %423 = vmatprep.subr.mxu0 0.0
      %424 = vmatpush2.msra.mxu0 0.0
      %425 = vmatprep.subr.mxu0 0.0
      %426 = vmatpush2.msra.mxu0 0.0
      %427 = vmatprep.subr.mxu0 0.0
      %428 = vmatpush2.msra.mxu0 0.0
      %429 = vmatprep.subr.mxu0 0.0
      %430 = vmatpush2.msra.mxu0 0.0
      %431 = vmatprep.subr.mxu0 0.0
      %432 = vmatpush2.msra.mxu0 0.0
      %433 = vmatprep.subr.mxu0 0.0
      %434 = vmatpush2.msra.mxu0 0.0
      %435 = vmatprep.mubr.f32.mxu0 0.0
      %436 = vmatmul.mubr.f32.gmra.mxu0 %v364
      %v437 = vpop.f32.mrf.mxu0
      %v438 = vadd.f32 0.0, %v437
      %v439 = vpop.f32.mrf.mxu0
      %v440 = vadd.f32 0.0, %v439
      %441 = vdwg.mxu0
      %v443 = vcombine.high %v356, %v356
      %v445 = vsel %vm362, %v358, 0
      %v447 = vsel %vm366, %v356, 0
      %v449 = vsel %vm366, %v443, 0
      %451 = vmatprep.subr.mxu0 0.0
      %452 = vmatpush1.msra.mxu0 0.0
      %453 = vmatprep.subr.mxu0 0.0
      %454 = vmatpush1.msra.mxu0 0.0
      %455 = vmatprep.subr.mxu0 0.0
      %456 = vmatpush1.msra.mxu0 0.0
      %457 = vmatprep.subr.mxu0 0.0
      %458 = vmatpush1.msra.mxu0 0.0
      %459 = vmatprep.subr.mxu0 0.0
      %460 = vmatpush1.msra.mxu0 0.0
      %461 = vmatprep.subr.mxu0 0.0
      %462 = vmatpush1.msra.mxu0 0.0
      %463 = vmatprep.subr.mxu0 0.0
      %464 = vmatpush1.msra.mxu0 0.0
      %465 = vmatprep.subr.mxu0 0.0
      %466 = vmatpush1.msra.mxu0 0.0
      %467 = vmatprep.subr.mxu0 0.0
      %468 = vmatpush1.msra.mxu0 0.0
      %469 = vmatprep.subr.mxu0 0.0
      %470 = vmatpush1.msra.mxu0 0.0
      %471 = vmatprep.subr.mxu0 0.0
      %472 = vmatpush1.msra.mxu0 0.0
      %473 = vmatprep.subr.mxu0 0.0
      %474 = vmatpush1.msra.mxu0 0.0
      %475 = vmatprep.subr.mxu0 0.0
      %476 = vmatpush1.msra.mxu0 0.0
      %477 = vmatprep.subr.mxu0 0.0
      %478 = vmatpush1.msra.mxu0 0.0
      %479 = vmatprep.subr.mxu0 0.0
      %480 = vmatpush1.msra.mxu0 0.0
      %481 = vmatprep.subr.mxu0 %v449
      %482 = vmatpush1.msra.mxu0 %v447
      %483 = vmatprep.subr.mxu0 0.0
      %484 = vmatpush2.msra.mxu0 0.0
      %485 = vmatprep.subr.mxu0 0.0
      %486 = vmatpush2.msra.mxu0 0.0
      %487 = vmatprep.subr.mxu0 0.0
      %488 = vmatpush2.msra.mxu0 0.0
      %489 = vmatprep.subr.mxu0 0.0
      %490 = vmatpush2.msra.mxu0 0.0
      %491 = vmatprep.subr.mxu0 0.0
      %492 = vmatpush2.msra.mxu0 0.0
      %493 = vmatprep.subr.mxu0 0.0
      %494 = vmatpush2.msra.mxu0 0.0
      %495 = vmatprep.subr.mxu0 0.0
      %496 = vmatpush2.msra.mxu0 0.0
      %497 = vmatprep.subr.mxu0 0.0
      %498 = vmatpush2.msra.mxu0 0.0
      %499 = vmatprep.subr.mxu0 0.0
      %500 = vmatpush2.msra.mxu0 0.0
      %501 = vmatprep.subr.mxu0 0.0
      %502 = vmatpush2.msra.mxu0 0.0
      %503 = vmatprep.subr.mxu0 0.0
      %504 = vmatpush2.msra.mxu0 0.0
      %505 = vmatprep.subr.mxu0 0.0
      %506 = vmatpush2.msra.mxu0 0.0
      %507 = vmatprep.subr.mxu0 0.0
      %508 = vmatpush2.msra.mxu0 0.0
      %509 = vmatprep.subr.mxu0 0.0
      %510 = vmatpush2.msra.mxu0 0.0
      %511 = vmatprep.subr.mxu0 0.0
      %512 = vmatpush2.msra.mxu0 0.0
      %513 = vmatprep.subr.mxu0 0.0
      %514 = vmatpush2.msra.mxu0 0.0
      %515 = vmatprep.mubr.f32.mxu0 0.0
      %516 = vmatmul.mubr.f32.gmra.mxu0 %v445
      %v517 = vpop.f32.mrf.mxu0
      %v518 = vadd.f32 %v438, %v517
      %v519 = vpop.f32.mrf.mxu0
      %v520 = vadd.f32 %v440, %v519
      %521 = vdwg.mxu0
      %v522 = vld [vmem:[%s4] sm:$0xff]
      %524 = vset.pattern.permute.xlu0 0
      %525 = vperm.xlu0 %524, %v522
      %v526 = vpop.permute.xlu0 %525
      %v528 = vadd.f32 %v518, %v526
      %v529 = vadd.f32 %v520, %v526
      %v530 = vmax.f32 %v528, 0.0
      %v531 = vmax.f32 %v529, 0.0
      %v532 = vld [vmem:[%s5] sm:$0xff]
      %534 = vset.pattern.permute.xlu0 0
      %535 = vperm.xlu0 %534, %v532
      %v536 = vpop.permute.xlu0 %535
      %v538 = vmul.f32 %v530, %v536
      %v539 = vmul.f32 %v531, %v536
      %v540 = vrot.slane %v538, 4
      %v541 = vadd.f32 %v538, %v540
      %v542 = vrot.slane %v541, 2
      %v543 = vadd.f32 %v541, %v542
      %v544 = vrot.slane %v543, 1
      %v545 = vadd.f32 %v543, %v544
      %v546 = vrot.slane %v539, 4
      %v547 = vadd.f32 %v539, %v546
      %v548 = vrot.slane %v547, 2
      %v549 = vadd.f32 %v547, %v548
      %v550 = vrot.slane %v549, 1
      %v551 = vadd.f32 %v549, %v550
      %v552 = vld [vmem:[#allocation2] sm:$0x1]
      %554 = vset.pattern.permute.xlu0 0
      %555 = vperm.xlu0 %554, %v552
      %v556 = vpop.permute.xlu0 %555
      %v558 = vlaneseq
      %v559 = vshrl.u32 %v558, 7
      %v560 = vsub.s32 0, %v559
      %v561 = vrot.slane %v556, %v560
      %v562 = vadd.f32 %v545, %v561
      %v563 = vadd.f32 %v551, %v561
      %v564 = vxor.u32 %v562, 2147483648
      %v565 = vxor.u32 %v563, 2147483648
      %v566 = vmul.f32 %v564, 1.442695
      %v567 = vpow.pop %v566
      %v568 = vmul.f32 %v565, 1.442695
      %v569 = vpow.pop %v568
      %v570 = vadd.f32 %v567, 1.0
      %v571 = vadd.f32 %v569, 1.0
      %v572 = vrcp.pop %v570
      %v573 = vmul.f32 1.0, %v572
      %v574 = vrcp.pop %v571
      %v575 = vmul.f32 1.0, %v574
      %v578 = vcombine.low %v573, %v575
      %v580 = vmul.f32 %v357, %v578
      %581 = vst [vmem:[%s354] sm:$0xff] %v580
      %s582 = smul.u32 2, %s25
      %p583 = scmp.lt.s32.totalorder %s24, 1
      %s584 = scalar_select %p583, %s24, 1
      %p585 = scmp.lt.s32.totalorder %s582, 1
      %s586 = scalar_select %p585, %s582, 1
      %s587 = smul.addr %s584, 2
      %s588 = sadd.s32 %s586, %s587
      %s589 = smul.addr %s588, 4
      %s590 = scalar_lea.vmem %s7, %s589
      // Predicated region
      $region49: #{attention_block.1} parent=47 // pred_check
        %p591 = pneg %p213
      $region50: #{attention_block.1} parent=47 // pred_check_branch
        %593 = sbr.rel (%p591) target = $region52
      $region51: #{attention_block.1} parent=47 // pred_region
        %s594 = smul.u32 2, %s25
      $region52: #{attention_block.1} parent=47 // pred_fallthru
        _
    $region48: #{attention_block.1} parent=5 // pred_fallthru
      _
    %p595 = scmp.le.s32.totalorder 2, %s15
    // Predicated region
    $region53: #{attention_block.1} parent=5 // pred_check
      %p596 = pneg %p595
    $region54: #{attention_block.1} parent=5 // pred_check_branch
      %598 = sbr.rel (%p596) target = $region56
    $region55: #{attention_block.1} parent=5 // pred_region
      %s599 = ssub.s32 %s15, 2
      // Predicated region
      $region57: #{attention_block.1} parent=55 // pred_check
        %p600 = pneg %p219
      $region58: #{attention_block.1} parent=55 // pred_check_branch
        %602 = sbr.rel (%p600) target = $region60
      $region59: #{attention_block.1} parent=55 // pred_region
        %s603 = smul.u32 2, %s27
        %p604 = scmp.lt.s32.totalorder %s26, 1
        %s605 = scalar_select %p604, %s26, 1
        %p606 = scmp.lt.s32.totalorder %s603, 1
        %s607 = scalar_select %p606, %s603, 1
        %s608 = smul.addr %s605, 2
        %s609 = sadd.s32 %s607, %s608
        %s610 = smul.addr %s609, 4
        %s611 = scalar_lea.vmem %s7, %s610
      $region60: #{attention_block.1} parent=55 // pred_fallthru
        _
    $region56: #{attention_block.1} parent=5 // pred_fallthru
      _
  $region6: #{attention_block.1} parent=0 // loop_footer
    %s19 = sadd.s32 1, %s15
  $region7: #{attention_block.1} parent=0 // loop_footer_branch
    %14 = sbr.rel target = $region3
  $region8: #{attention_block.1} parent=0 // loop_exit
    _

</llo_original>
